<compile_context>
chip_gen: v7x
topology: tpu7x:2x2x1
jax: 0.10.0
libtpu: 0.0.40
codegen_flags: <defaults>
</compile_context>

<pallas_src>
import jax
import jax.numpy as jnp
from jax import lax
from jax.experimental import pallas as pl
from jax.experimental.pallas import tpu as pltpu


def _conv_bn_pool_relu_kernel(p_ref, w_ref, shift_ref, o_ref):
    # p_ref:     (K, 4*TM) bf16  im2col patches; columns ordered [q=0 | q=1 | q=2 | q=3]
    #                            for the 4 positions of each 2x2 pool window of this tile
    # w_ref:     (Cout, K) bf16  conv weight with BN scale folded in
    # shift_ref: (Cout, 1) f32   (conv_bias - running_mean) * scale + beta
    # o_ref:     (Cout, TM)      lane-dense output tile
    tm = o_ref.shape[1]

    # Single MXU pass covering all 4 pool-window positions.
    y = jnp.dot(w_ref[...], p_ref[...], preferred_element_type=jnp.float32)  # (Cout, 4*TM)

    # MaxPool2d(2, 2): max over the 4 lane-aligned q-sections (static, 128-aligned slices).
    acc = jnp.maximum(
        jnp.maximum(y[:, 0 * tm:1 * tm], y[:, 1 * tm:2 * tm]),
        jnp.maximum(y[:, 2 * tm:3 * tm], y[:, 3 * tm:4 * tm]),
    )

    # + per-channel shift (commutes with the max), ReLU.  Dropout is identity in eval mode.
    o_ref[...] = jnp.maximum(acc + shift_ref[...], 0.0).astype(o_ref.dtype)


def convolution_layer_forward(x, conv_w, conv_b, gamma, beta, run_mean, run_var,
                              *, eps=1e-5, tile_m=None):
    """x: NCHW float32. Conv2d(k=3, pad=1, stride=1) -> BN(eval) -> MaxPool(2,2) -> ReLU."""
    N, Cin, H, W = x.shape
    Cout, _, KH, KW = conv_w.shape
    pad = 1
    Ho, Wo = H, W                 # stride 1, padding 1, kernel 3 -> same spatial size
    Hp, Wp = Ho // 2, Wo // 2     # after MaxPool2d(2, 2)
    K = Cin * KH * KW
    M = N * Hp * Wp

    # Pad the lane axis to a multiple of 128 so output stores are unmasked; padded columns are
    # zero patches (conv -> 0), harmless through max/shift/relu, and sliced off afterwards.
    Mp = ((M + 127) // 128) * 128

    if tile_m is None:
        tile_m = 128
        for cand in (512, 384, 256, 128):
            if Mp % cand == 0:
                tile_m = cand
                break
    assert tile_m % 128 == 0 and Mp % tile_m == 0, (Mp, tile_m)
    nt = Mp // tile_m

    # ---- wrapper glue: im2col + pool-window phase split (reshape/transpose only) ----
    # TODO(synk): at realistic image sizes, build the im2col rows inside the kernel from the
    # padded input in HBM (memory_space=pl.ANY) to avoid the ~9x HBM read amplification of
    # materializing the patches array.
    x_pad = jnp.pad(x, ((0, 0), (0, 0), (pad, pad), (pad, pad)))
    cols = [x_pad[:, :, kh:kh + Ho, kw:kw + Wo] for kh in range(KH) for kw in range(KW)]
    patches = jnp.stack(cols, axis=2)                 # [N, Cin, KH*KW, Ho, Wo]
    patches = patches.reshape(N, K, Ho, Wo)           # K ordered (ci, kh, kw) = PyTorch OIHW flatten
    patches = patches.reshape(N, K, Hp, 2, Wp, 2)     # split pooling windows: ho = 2*hp + ph
    # -> (K, q=(ph,pw), m=(n,hp,wp))
    patches = jnp.transpose(patches, (1, 3, 5, 0, 2, 4)).reshape(K, 4, M)
    if Mp != M:
        patches = jnp.pad(patches, ((0, 0), (0, 0), (0, Mp - M)))
    # interleave so each grid tile sees its 4 q-sections contiguously: columns = (i, q, j)
    patches = patches.reshape(K, 4, nt, tile_m)
    patches = jnp.transpose(patches, (0, 2, 1, 3)).reshape(K, nt * 4 * tile_m)

    # Fold BN scale into the weight (per output channel); keep the shift separate (applied
    # after the max inside the kernel).
    scale = gamma / jnp.sqrt(run_var + eps)                       # (Cout,)
    w_mat = conv_w.reshape(Cout, K) * scale[:, None]              # (Cout, K), scale folded
    shift = ((conv_b - run_mean) * scale + beta).reshape(Cout, 1).astype(jnp.float32)

    # ---- Pallas kernel: fused conv matmul + maxpool + BN shift + relu ----
    out = pl.pallas_call(
        _conv_bn_pool_relu_kernel,
        out_shape=jax.ShapeDtypeStruct((Cout, Mp), x.dtype),
        grid_spec=pltpu.PrefetchScalarGridSpec(
            num_scalar_prefetch=0,
            grid=(nt,),
            in_specs=[
                pl.BlockSpec((K, 4 * tile_m), lambda i: (0, i)),
                pl.BlockSpec((Cout, K), lambda i: (0, 0)),
                pl.BlockSpec((Cout, 1), lambda i: (0, 0)),
            ],
            out_specs=pl.BlockSpec((Cout, tile_m), lambda i: (0, i)),
        ),
        compiler_params=pltpu.CompilerParams(dimension_semantics=("parallel",)),
    )(patches.astype(jnp.bfloat16), w_mat.astype(jnp.bfloat16), shift)

    # drop lane padding, back to NCHW
    out = out[:, :M].reshape(Cout, N, Hp, Wp)
    out = jnp.transpose(out, (1, 0, 2, 3))
    # residule branch: in_channels (4) != out_channels (8) -> no residual add for this config.
    # TODO(synk): training-mode Dropout masking / batch-stat BatchNorm not implemented (eval mode).
    return out


def reference(x, conv_w, conv_b, gamma, beta, run_mean, run_var, eps=1e-5):
    y = lax.conv_general_dilated(
        x, conv_w, window_strides=(1, 1), padding=((1, 1), (1, 1)),
        dimension_numbers=("NCHW", "OIHW", "NCHW"))
    y = y + conv_b[None, :, None, None]
    y = (y - run_mean[None, :, None, None]) * (gamma / jnp.sqrt(run_var + eps))[None, :, None, None] \
        + beta[None, :, None, None]
    y = lax.reduce_window(y, -jnp.inf, lax.max, (1, 1, 2, 2), (1, 1, 2, 2), "VALID")
    return jnp.maximum(y, 0.0)


if __name__ == "__main__":
    key = jax.random.PRNGKey(0)
    ks = jax.random.split(key, 7)

    N, Cin, H, W = 2, 4, 16, 16
    Cout, KH, KW = 8, 3, 3

    x = jax.random.normal(ks[0], (N, Cin, H, W), jnp.float32)
    conv_w = 0.1 * jax.random.normal(ks[1], (Cout, Cin, KH, KW), jnp.float32)
    conv_b = 0.1 * jax.random.normal(ks[2], (Cout,), jnp.float32)
    gamma = 1.0 + 0.1 * jax.random.normal(ks[3], (Cout,), jnp.float32)
    beta = 0.1 * jax.random.normal(ks[4], (Cout,), jnp.float32)
    run_mean = 0.05 * jax.random.normal(ks[5], (Cout,), jnp.float32)
    run_var = 1.0 + 0.1 * jnp.abs(jax.random.normal(ks[6], (Cout,), jnp.float32))

    out = convolution_layer_forward(x, conv_w, conv_b, gamma, beta, run_mean, run_var)
    out = jax.block_until_ready(out)

    ref = reference(x, conv_w, conv_b, gamma, beta, run_mean, run_var)
    assert out.shape == (N, Cout, H // 2, W // 2), out.shape
    # bf16 MXU inputs -> loosened tolerance vs the f32 reference.
    assert jnp.allclose(out, ref, atol=3e-2, rtol=3e-2), float(jnp.max(jnp.abs(out - ref)))

    print("KERNEL_OK")
</pallas_src>

<mosaic_0001>
module attributes {stable_mosaic.version = 11 : i64} {
  func.func @_conv_bn_pool_relu_kernel(%arg0: i32, %arg1: memref<36x512xbf16, #tpu.memory_space<vmem>>, %arg2: memref<8x36xbf16, #tpu.memory_space<vmem>>, %arg3: memref<8x1xf32, #tpu.memory_space<vmem>>, %arg4: memref<8x128xf32, #tpu.memory_space<vmem>>) attributes {dimension_semantics = [#tpu.dimension_semantics<parallel>], iteration_bounds = array<i64: 1>, scalar_prefetch = 0 : i64, scratch_operands = 0 : i64, tpu.core_type = #tpu.core_type<tc>, window_params = [{transform_indices = @transform_0, window_bounds = array<i64: 36, 512>}, {pipeline_mode = #tpu.pipeline_mode<synchronous>, transform_indices = @transform_1, window_bounds = array<i64: 8, 36>}, {pipeline_mode = #tpu.pipeline_mode<synchronous>, transform_indices = @transform_2, window_bounds = array<i64: 8, 1>}, {transform_indices = @transform_3, window_bounds = array<i64: 8, 128>}]} {
    %c0 = arith.constant 0 : index
    %c0_0 = arith.constant 0 : index
    %0 = vector.load %arg2[%c0, %c0_0] : memref<8x36xbf16, #tpu.memory_space<vmem>>, vector<8x36xbf16>
    %c0_1 = arith.constant 0 : index
    %c0_2 = arith.constant 0 : index
    %1 = vector.load %arg1[%c0_1, %c0_2] : memref<36x512xbf16, #tpu.memory_space<vmem>>, vector<36x512xbf16>
    %cst = arith.constant dense<0.000000e+00> : vector<8x512xf32>
    %2 = tpu.matmul %0, %1, %cst {dimension_numbers = #tpu.dot_dimension_numbers<[1], [0], [0], [1], [0, 0, 1, 1], [], []>} : vector<8x36xbf16>, vector<36x512xbf16>, vector<8x512xf32> -> vector<8x512xf32>
    %3 = vector.extract_strided_slice %2 {offsets = [0, 0], sizes = [8, 128], strides = [1, 1]} : vector<8x512xf32> to vector<8x128xf32>
    %4 = vector.extract_strided_slice %2 {offsets = [0, 128], sizes = [8, 128], strides = [1, 1]} : vector<8x512xf32> to vector<8x128xf32>
    %5 = arith.maximumf %3, %4 : vector<8x128xf32>
    %6 = vector.extract_strided_slice %2 {offsets = [0, 256], sizes = [8, 128], strides = [1, 1]} : vector<8x512xf32> to vector<8x128xf32>
    %7 = vector.extract_strided_slice %2 {offsets = [0, 384], sizes = [8, 128], strides = [1, 1]} : vector<8x512xf32> to vector<8x128xf32>
    %8 = arith.maximumf %6, %7 : vector<8x128xf32>
    %9 = arith.maximumf %5, %8 : vector<8x128xf32>
    %c0_3 = arith.constant 0 : index
    %c0_4 = arith.constant 0 : index
    %10 = vector.load %arg3[%c0_3, %c0_4] : memref<8x1xf32, #tpu.memory_space<vmem>>, vector<8x1xf32>
    %11 = vector.broadcast %10 : vector<8x1xf32> to vector<8x128xf32>
    %12 = arith.addf %9, %11 : vector<8x128xf32>
    %cst_5 = arith.constant 0.000000e+00 : f32
    %13 = vector.broadcast %cst_5 : f32 to vector<8x128xf32>
    %14 = arith.maximumf %12, %13 : vector<8x128xf32>
    %c0_6 = arith.constant 0 : index
    %c0_7 = arith.constant 0 : index
    %15 = vector.load %arg4[%c0_6, %c0_7] : memref<8x128xf32, #tpu.memory_space<vmem>>, vector<8x128xf32>
    tpu.vector_store %arg4[%c0_6, %c0_7], %14 {strides = array<i32>} : memref<8x128xf32, #tpu.memory_space<vmem>>, vector<8x128xf32>,
    return
  }
  func.func @transform_0(%arg0: i32) -> (i32, i32) {
    %c0_i32 = arith.constant 0 : i32
    %c0_i32_0 = arith.constant 0 : i32
    return %c0_i32, %arg0 : i32, i32
  }
  func.func @transform_1(%arg0: i32) -> (i32, i32) {
    %c0_i32 = arith.constant 0 : i32
    %c0_i32_0 = arith.constant 0 : i32
    %c0_i32_1 = arith.constant 0 : i32
    return %c0_i32, %c0_i32_0 : i32, i32
  }
  func.func @transform_2(%arg0: i32) -> (i32, i32) {
    %c0_i32 = arith.constant 0 : i32
    %c0_i32_0 = arith.constant 0 : i32
    %c0_i32_1 = arith.constant 0 : i32
    return %c0_i32, %c0_i32_0 : i32, i32
  }
  func.func @transform_3(%arg0: i32) -> (i32, i32) {
    %c0_i32 = arith.constant 0 : i32
    %c0_i32_0 = arith.constant 0 : i32
    return %c0_i32, %arg0 : i32, i32
  }
}

</mosaic_0001>

<llo_original>
// kernel: tpu_custom_call.1
$region0: #{tpu_custom_call.1}
  #allocation0 [shape = 'u32[]', space=smem, size = 0x4, offset = 0x4, fixed_abs, tag = 'smem constant byte address 0x4 - core index']
  #allocation1 [shape = 'u32[144,128]{1,0:T(1,128)}', space=vmem, size = 0x12000, scoped, tag = 'internal scratch']
  %s0 = inlined_call_operand.hbm [shape: bf16[36,512], index: 0, kind: input, shape index: {}]
  %s1 = inlined_call_operand.vmem [shape: bf16[8,36], index: 1, kind: input, shape index: {}]
  %s2 = inlined_call_operand.vmem [shape: f32[8,1], index: 2, kind: input, shape index: {}]
  %s3 = inlined_call_operand.hbm [shape: f32[8,128], index: 3, kind: output, shape index: {}]
  %s4 = sld [smem:[#allocation0]]
  $region26: #{tpu_custom_call.1} parent=0
    _
  %s6 = ssub.s32 1, %s4
  %s7 = scalar_select 0, %s6, %s4
  $region1: #{tpu_custom_call.1} parent=0
    #allocation2 [shape = 'u8[40960]{0}', space=vmem, size = 0xa000, scoped, tag = 'input window, operand 0, single buffered']
    #allocation3 [shape = 's32[1]{0}', space=sflag, size = 0x4, scoped, tag = 'scoped memory for tpu_custom_call.1']
    #allocation4 [shape = 's32[1]{0}', space=sflag, size = 0x4, scoped, tag = 'scoped memory for tpu_custom_call.1']
    #allocation5 [shape = 'u8[4096]{0}', space=vmem, size = 0x1000, scoped, tag = 'output window, operand 0, single buffered']
    %8 = vsyncpa [#allocation3], 0
    %9 = vsyncpa [#allocation4], 0
    // Predicated region
    $region2: #{tpu_custom_call.1} parent=1 // pred_check
      _
    $region3: #{tpu_custom_call.1} parent=1 // pred_check_branch
      %11 = sbr.rel (0) target = $region5
    $region4: #{tpu_custom_call.1} parent=1 // pred_region
      %s13 = ssub.s32 1280, 1280
      %14 = vsyncadd [#allocation3], %s13
      %s15 = sshll.u32 [#allocation2], 4
      %s16 = int_to_ptr.vmem [resolvable:$true] %s15
      %21 = dma.hbm_to_vmem [thread:$0]  %s0, 1280, %s16, [#allocation3], 256, 256, 16
    $region5: #{tpu_custom_call.1} parent=1 // pred_fallthru
      _
    // Predicated region
    $region6: #{tpu_custom_call.1} parent=1 // pred_check
      _
    $region7: #{tpu_custom_call.1} parent=1 // pred_check_branch
      %23 = sbr.rel (0) target = $region9
    $region8: #{tpu_custom_call.1} parent=1 // pred_region
      _
    $region9: #{tpu_custom_call.1} parent=1 // pred_fallthru
      _
    // Predicated region
    $region10: #{tpu_custom_call.1} parent=1 // pred_check
      _
    $region11: #{tpu_custom_call.1} parent=1 // pred_check_branch
      %25 = sbr.rel (0) target = $region13
    $region12: #{tpu_custom_call.1} parent=1 // pred_region
      _
    $region13: #{tpu_custom_call.1} parent=1 // pred_fallthru
      _
    // Predicated region
    $region14: #{tpu_custom_call.1} parent=1 // pred_check
      _
    $region15: #{tpu_custom_call.1} parent=1 // pred_check_branch
      %27 = sbr.rel (0) target = $region17
    $region16: #{tpu_custom_call.1} parent=1 // pred_region
      %28 = dma.done [#allocation3], 1280
    $region17: #{tpu_custom_call.1} parent=1 // pred_fallthru
      _
    %v30 = vld [vmem:[%s1] sm:$0xf]
    %v31 = vld [vmem:[#allocation2] sm:$0xff]
    %v32 = vld [vmem:[#allocation2 + $0x8] sm:$0xff]
    %v33 = vld [vmem:[#allocation2 + $0x10] sm:$0xff]
    %v34 = vld [vmem:[#allocation2 + $0x18] sm:$0xff]
    %v35 = vld [vmem:[#allocation2 + $0x20] sm:$0xff]
    %v36 = vld [vmem:[#allocation2 + $0x28] sm:$0xff]
    %v37 = vld [vmem:[#allocation2 + $0x30] sm:$0xff]
    %v38 = vld [vmem:[#allocation2 + $0x38] sm:$0xff]
    %v39 = vld [vmem:[#allocation2 + $0x40] sm:$0x33]
    %v40 = vld [vmem:[#allocation2 + $0x48] sm:$0x33]
    %v51 = vunpack.c.l.b16 %v31
    %v52 = vunpack.c.h.b16 %v31
    %v53 = vunpack.c.l.b16 %v32
    %v54 = vunpack.c.h.b16 %v32
    %v55 = vunpack.c.l.b16 %v33
    %v56 = vunpack.c.h.b16 %v33
    %v57 = vunpack.c.l.b16 %v34
    %v58 = vunpack.c.h.b16 %v34
    %v59 = vunpack.c.l.b16 %v35
    %v60 = vunpack.c.h.b16 %v35
    %v61 = vunpack.c.l.b16 %v36
    %v62 = vunpack.c.h.b16 %v36
    %v63 = vunpack.c.l.b16 %v37
    %v64 = vunpack.c.h.b16 %v37
    %v65 = vunpack.c.l.b16 %v38
    %v66 = vunpack.c.h.b16 %v38
    %v67 = vunpack.c.l.b16 %v39
    %v68 = vunpack.c.h.b16 %v39
    %v69 = vunpack.c.l.b16 %v40
    %v70 = vunpack.c.h.b16 %v40
    %v71 = vpack.c.b16 %v55, %v51
    %v72 = vpack.c.b16 %v56, %v52
    %v73 = vpack.c.b16 %v57, %v53
    %v74 = vpack.c.b16 %v58, %v54
    %v75 = vpack.c.b16 %v63, %v59
    %v76 = vpack.c.b16 %v64, %v60
    %v77 = vpack.c.b16 %v65, %v61
    %v78 = vpack.c.b16 %v66, %v62
    %v79 = vpack.c.b16 %v67, %v67
    %v80 = vpack.c.b16 %v68, %v68
    %v81 = vpack.c.b16 %v69, %v69
    %v82 = vpack.c.b16 %v70, %v70
    %vm91 = vcmask 293888
    %v93 = vsel %vm91, %v30, 0
    %vm95 = vcmask 1041408
    %v97 = vsel %vm95, %v79, 0
    %v100 = vsel %vm95, %v80, 0
    %v103 = vsel %vm95, %v81, 0
    %v106 = vsel %vm95, %v82, 0
    %108 = vmatprep.subr.bf16.mxu0 %v72
    %109 = vmatpush1.bf16.msra.mxu0 %v71
    %110 = vmatprep.subr.bf16.mxu0 %v76
    %111 = vmatpush1.bf16.msra.mxu0 %v75
    %112 = vmatprep.subr.bf16.mxu0 %v100
    %113 = vmatpush1.bf16.msra.mxu0 %v97
    %114 = vmatprep.subr.bf16.mxu0 0
    %115 = vmatpush1.bf16.msra.mxu0 0
    %116 = vmatprep.subr.bf16.mxu0 0
    %117 = vmatpush1.bf16.msra.mxu0 0
    %118 = vmatprep.subr.bf16.mxu0 0
    %119 = vmatpush1.bf16.msra.mxu0 0
    %120 = vmatprep.subr.bf16.mxu0 0
    %121 = vmatpush1.bf16.msra.mxu0 0
    %122 = vmatprep.subr.bf16.mxu0 0
    %123 = vmatpush1.bf16.msra.mxu0 0
    %124 = vmatprep.subr.bf16.mxu0 0
    %125 = vmatpush1.bf16.msra.mxu0 0
    %126 = vmatprep.subr.bf16.mxu0 0
    %127 = vmatpush1.bf16.msra.mxu0 0
    %128 = vmatprep.subr.bf16.mxu0 0
    %129 = vmatpush1.bf16.msra.mxu0 0
    %130 = vmatprep.subr.bf16.mxu0 0
    %131 = vmatpush1.bf16.msra.mxu0 0
    %132 = vmatprep.subr.bf16.mxu0 0
    %133 = vmatpush1.bf16.msra.mxu0 0
    %134 = vmatprep.subr.bf16.mxu0 0
    %135 = vmatpush1.bf16.msra.mxu0 0
    %136 = vmatprep.subr.bf16.mxu0 0
    %137 = vmatpush1.bf16.msra.mxu0 0
    %138 = vmatprep.subr.bf16.mxu0 0
    %139 = vmatpush1.bf16.msra.mxu0 0
    %140 = vmatprep.mubr.bf16.mxu0 0
    %141 = vmatmul.mubr.bf16.gmra.mrb[0].mxu0 %v93
    %v142 = vpop.f32.mrb[0].mxu0
    %v143 = vadd.f32 0.0, %v142
    %v144 = vpop.f32.mrb[0].mxu0
    %v145 = vadd.f32 0.0, %v144
    %v146 = vpop.f32.mrb[0].mxu0
    %v147 = vpop.f32.mrb[0].mxu0
    %148 = vdwg.mxu0
    %149 = vmatprep.subr.bf16.mxu0 %v74
    %150 = vmatpush1.bf16.msra.mxu0 %v73
    %151 = vmatprep.subr.bf16.mxu0 %v78
    %152 = vmatpush1.bf16.msra.mxu0 %v77
    %153 = vmatprep.subr.bf16.mxu0 %v106
    %154 = vmatpush1.bf16.msra.mxu0 %v103
    %155 = vmatprep.subr.bf16.mxu0 0
    %156 = vmatpush1.bf16.msra.mxu0 0
    %157 = vmatprep.subr.bf16.mxu0 0
    %158 = vmatpush1.bf16.msra.mxu0 0
    %159 = vmatprep.subr.bf16.mxu0 0
    %160 = vmatpush1.bf16.msra.mxu0 0
    %161 = vmatprep.subr.bf16.mxu0 0
    %162 = vmatpush1.bf16.msra.mxu0 0
    %163 = vmatprep.subr.bf16.mxu0 0
    %164 = vmatpush1.bf16.msra.mxu0 0
    %165 = vmatprep.subr.bf16.mxu0 0
    %166 = vmatpush1.bf16.msra.mxu0 0
    %167 = vmatprep.subr.bf16.mxu0 0
    %168 = vmatpush1.bf16.msra.mxu0 0
    %169 = vmatprep.subr.bf16.mxu0 0
    %170 = vmatpush1.bf16.msra.mxu0 0
    %171 = vmatprep.subr.bf16.mxu0 0
    %172 = vmatpush1.bf16.msra.mxu0 0
    %173 = vmatprep.subr.bf16.mxu0 0
    %174 = vmatpush1.bf16.msra.mxu0 0
    %175 = vmatprep.subr.bf16.mxu0 0
    %176 = vmatpush1.bf16.msra.mxu0 0
    %177 = vmatprep.subr.bf16.mxu0 0
    %178 = vmatpush1.bf16.msra.mxu0 0
    %179 = vmatprep.subr.bf16.mxu0 0
    %180 = vmatpush1.bf16.msra.mxu0 0
    %181 = vmatprep.mubr.bf16.mxu0 0
    %182 = vmatmul.mubr.bf16.gmra.mrb[0].mxu0 %v93
    %v183 = vpop.f32.mrb[0].mxu0
    %v184 = vadd.f32 0.0, %v183
    %v185 = vpop.f32.mrb[0].mxu0
    %v186 = vadd.f32 0.0, %v185
    %v187 = vpop.f32.mrb[0].mxu0
    %v188 = vpop.f32.mrb[0].mxu0
    %189 = vdwg.mxu0
    %v190 = vmax.f32 %v143, %v145
    %v191 = vmax.f32 %v184, %v186
    %v192 = vmax.f32 %v190, %v191
    %v193 = vld [vmem:[%s2] sm:$0xff]
    %195 = vset.pattern.permute.xlu0 0
    %196 = vperm.xlu0 %195, %v193
    %v197 = vpop.permute.xlu0 %196
    %v199 = vadd.f32 %v192, %v197
    %v200 = vmax.f32 %v199, 0.0
    %201 = vst [vmem:[#allocation5] sm:$0xff] %v200
    // Predicated region
    $region18: #{tpu_custom_call.1} parent=1 // pred_check
      _
    $region19: #{tpu_custom_call.1} parent=1 // pred_check_branch
      %203 = sbr.rel (0) target = $region21
    $region20: #{tpu_custom_call.1} parent=1 // pred_region
      %s205 = ssub.s32 128, 128
      %206 = vsyncadd [#allocation4], %s205
      %s208 = sshll.u32 [#allocation5], 4
      %s209 = int_to_ptr.vmem [resolvable:$true] %s208
      %211 = dma.vmem_to_hbm [thread:$0]  %s209, 128, %s3, [#allocation4]
    $region21: #{tpu_custom_call.1} parent=1 // pred_fallthru
      _
    // Predicated region
    $region22: #{tpu_custom_call.1} parent=1 // pred_check
      _
    $region23: #{tpu_custom_call.1} parent=1 // pred_check_branch
      %213 = sbr.rel (0) target = $region25
    $region24: #{tpu_custom_call.1} parent=1 // pred_region
      %214 = dma.done [#allocation4], 128
    $region25: #{tpu_custom_call.1} parent=1 // pred_fallthru
      _
    %215 = vsyncpa [#allocation3], 1
    %216 = vsyncpa [#allocation4], 1

</llo_original>
